<compile_context>
chip_gen: v5e
topology: v5e:2x2
jax: 0.10.0
libtpu: 0.0.40
codegen_flags: <defaults>
</compile_context>

<pallas_src>
import jax
import jax.numpy as jnp
from jax import lax
from jax.experimental import pallas as pl
from jax.experimental.pallas import tpu as pltpu


def note_encoder_kernel(ids_ref, proj_table_ref, w_hh_ref, h_out_ref, x_scratch):
    """ids_ref       : (seq_len * b_pad, 1) int32 token ids, time-major rows.
    proj_table_ref : (vocab_pad, 4H) f32 = emb @ W_ih^T + (b_ih + b_hh),
                     gate columns permuted to [i, f, o, g].
    w_hh_ref       : (H, 4H) f32 = W_hh^T, gate columns permuted to [i, f, o, g].
    h_out_ref      : (b_pad, H) f32 final hidden state.
    x_scratch      : (seq_len * b_pad, 4H) f32 VMEM scratch for x_proj."""
    n_rows, four_h = x_scratch.shape
    H = four_h // 4
    b_pad = h_out_ref.shape[0]
    seq_len = n_rows // b_pad
    vocab_pad = proj_table_ref.shape[0]

    # ---- fused embedding lookup + input projection (one MXU pass) ----------
    # onehot[r, v] = (note_row r == vocab id v); onehot @ proj_table selects the
    # pre-projected embedding rows exactly (0/1 weights => bit-exact gather).
    ids = ids_ref[...]                                              # (n_rows, 1)
    vocab_iota = lax.broadcasted_iota(jnp.int32, (n_rows, vocab_pad), 1)
    onehot = (vocab_iota == ids).astype(jnp.float32)                # (n_rows, vocab_pad)
    x_scratch[...] = jnp.dot(onehot, proj_table_ref[...],
                             preferred_element_type=jnp.float32)

    # Recurrent weights: loaded once, resident in vregs for all timesteps.
    w_hh = w_hh_ref[...]                                            # (H, 4H)

    # sigmoid(x) = 0.5*(tanh(x/2)+1).  Gate columns are [i, f, o | g], so one
    # full-vreg tanh with a per-lane argument scale (0.5 on the sigmoid lanes,
    # 1.0 on the g lanes) covers all four gate activations in a single EUP pass.
    lane = lax.broadcasted_iota(jnp.int32, (1, four_h), 1)
    act_scale = jnp.where(lane < 3 * H, jnp.float32(0.5), jnp.float32(1.0))
    act_scale = jnp.broadcast_to(act_scale, (b_pad, four_h))        # hoisted broadcast

    h0 = jnp.zeros((b_pad, H), jnp.float32)
    c0 = jnp.zeros((b_pad, H), jnp.float32)

    def step(t, carry):
        h, c = carry
        row0 = pl.multiple_of(t * b_pad, b_pad)
        x_t = x_scratch[pl.ds(row0, b_pad), :]                      # (b_pad, 4H)
        gates = x_t + jnp.dot(h, w_hh, preferred_element_type=jnp.float32)
        th = jnp.tanh(gates * act_scale)                            # one EUP pass
        ifo = 0.5 * (th[:, 0:3 * H] + 1.0)                          # sigmoid(i, f, o)
        i = ifo[:, 0 * H:1 * H]
        f = ifo[:, 1 * H:2 * H]
        o = ifo[:, 2 * H:3 * H]
        g = th[:, 3 * H:4 * H]
        c_new = f * c + i * g
        h_new = o * jnp.tanh(c_new)                                 # second EUP pass
        return (h_new, c_new)

    # Fully unrolled serial recurrence; h/c never round-trip through VMEM.
    # (Cap the unroll factor if seq_len ever grows into the hundreds.)
    h_final, _ = lax.fori_loop(0, seq_len, step, (h0, c0), unroll=True)
    h_out_ref[...] = h_final.astype(h_out_ref.dtype)


def prepare_note_encoder_params(embedding_table, w_ih, w_hh, b_ih, b_hh):
    """One-time, weight-only preprocessing (hoisted out of the per-call path)."""
    H = w_hh.shape[1]
    # Permute gate columns from PyTorch's [i, f, g, o] to [i, f, o, g] so the
    # kernel applies one contiguous sigmoid over lanes [0, 3H) and tanh over
    # [3H, 4H).
    perm = jnp.concatenate([jnp.arange(0, 2 * H),
                            jnp.arange(3 * H, 4 * H),
                            jnp.arange(2 * H, 3 * H)])
    w_ih_p = jnp.asarray(w_ih, jnp.float32)[perm]                   # (4H, E)
    w_hh_p = jnp.asarray(w_hh, jnp.float32)[perm]                   # (4H, H)
    b_p = (jnp.asarray(b_ih, jnp.float32) + jnp.asarray(b_hh, jnp.float32))[perm]

    emb = jnp.asarray(embedding_table, jnp.float32)
    proj_table = emb @ w_ih_p.T + b_p                               # (vocab, 4H)
    vocab = proj_table.shape[0]
    vocab_pad = max(128, ((vocab + 127) // 128) * 128)              # lane-aligned K
    proj_table = jnp.pad(proj_table, ((0, vocab_pad - vocab), (0, 0)))

    return {
        "proj_table": proj_table,                                   # (vocab_pad, 4H)
        "w_hh_t": w_hh_p.T,                                         # (H, 4H)
        "hidden": H,
    }


def note_encoder_forward(note, note_lengths, params):
    """note: (seq_len, batch) int32; returns (batch, hidden) f32."""
    del note_lengths  # unused by the PyTorch forward (pack result discarded)

    seq_len, batch = note.shape
    hidden = params["hidden"]

    # Pad batch up to a full sublane group so h/c/gates tiles are full vregs.
    b_pad = max(8, ((batch + 7) // 8) * 8)
    note_p = jnp.pad(note.astype(jnp.int32), ((0, 0), (0, b_pad - batch)))
    ids_col = note_p.reshape(seq_len * b_pad, 1)                    # time-major rows

    h_out = pl.pallas_call(
        note_encoder_kernel,
        out_shape=jax.ShapeDtypeStruct((b_pad, hidden), jnp.float32),
        in_specs=[
            pl.BlockSpec(memory_space=pltpu.MemorySpace.VMEM),      # ids
            pl.BlockSpec(memory_space=pltpu.MemorySpace.VMEM),      # proj_table
            pl.BlockSpec(memory_space=pltpu.MemorySpace.VMEM),      # w_hh_t
        ],
        out_specs=pl.BlockSpec(memory_space=pltpu.MemorySpace.VMEM),
        scratch_shapes=[pltpu.VMEM((seq_len * b_pad, 4 * hidden), jnp.float32)],
    )(ids_col, params["proj_table"], params["w_hh_t"])

    return h_out[:batch]


def reference_forward(note, embedding_table, w_ih, w_hh, b_ih, b_hh):
    """Pure-JAX reference (mirrors torch.nn.LSTM single layer) for validation."""
    x = jnp.take(embedding_table, note, axis=0).astype(jnp.float32)
    H = w_hh.shape[1]
    b = b_ih + b_hh

    def step(carry, x_t):
        h, c = carry
        gates = x_t @ w_ih.T + h @ w_hh.T + b
        i = jax.nn.sigmoid(gates[:, 0 * H:1 * H])
        f = jax.nn.sigmoid(gates[:, 1 * H:2 * H])
        g = jnp.tanh(gates[:, 2 * H:3 * H])
        o = jax.nn.sigmoid(gates[:, 3 * H:4 * H])
        c = f * c + i * g
        h = o * jnp.tanh(c)
        return (h, c), None

    batch = note.shape[1]
    h0 = jnp.zeros((batch, H), jnp.float32)
    c0 = jnp.zeros((batch, H), jnp.float32)
    (h_final, _), _ = lax.scan(step, (h0, c0), x)
    return h_final


if __name__ == "__main__":
    key = jax.random.PRNGKey(0)

    vocab_size = 50
    embedding_length = 16
    hidden_size = 32
    seq_len = 8
    batch = 4

    k_emb, k_wih, k_whh, k_bih, k_bhh, k_note, k_len = jax.random.split(key, 7)

    # Deterministic synthetic parameters (shapes match nn.Embedding + nn.LSTM).
    embedding_table = jax.random.normal(k_emb, (vocab_size, embedding_length), jnp.float32) * 0.1
    w_ih = jax.random.normal(k_wih, (4 * hidden_size, embedding_length), jnp.float32) * 0.1
    w_hh = jax.random.normal(k_whh, (4 * hidden_size, hidden_size), jnp.float32) * 0.1
    b_ih = jax.random.normal(k_bih, (4 * hidden_size,), jnp.float32) * 0.1
    b_hh = jax.random.normal(k_bhh, (4 * hidden_size,), jnp.float32) * 0.1

    note = jax.random.randint(k_note, (seq_len, batch), 0, vocab_size, jnp.int32)
    note_lengths = jax.random.randint(k_len, (batch,), 1, seq_len + 1, jnp.int32)

    # One-time weight preprocessing (reused across forward calls).
    params = prepare_note_encoder_params(embedding_table, w_ih, w_hh, b_ih, b_hh)
    forward = jax.jit(lambda n, nl: note_encoder_forward(n, nl, params))

    out = jax.block_until_ready(forward(note, note_lengths))

    ref = reference_forward(note, embedding_table, w_ih, w_hh, b_ih, b_hh)
    assert out.shape == (batch, hidden_size)
    assert jnp.allclose(out, ref, atol=1e-5, rtol=1e-5), "mismatch vs reference"

    print("KERNEL_OK")
</pallas_src>

<mosaic_0001>
module attributes {stable_mosaic.version = 11 : i64} {
  func.func @note_encoder_kernel(%arg0: memref<64x1xi32, #tpu.memory_space<vmem>>, %arg1: memref<128x128xf32, #tpu.memory_space<vmem>>, %arg2: memref<32x128xf32, #tpu.memory_space<vmem>>, %arg3: memref<8x32xf32, #tpu.memory_space<vmem>>, %arg4: memref<64x128xf32, #tpu.memory_space<vmem>>) attributes {dimension_semantics = [], scalar_prefetch = 0 : i64, scratch_operands = 1 : i64, tpu.core_type = #tpu.core_type<tc>} {
    %c0 = arith.constant 0 : index
    %c0_0 = arith.constant 0 : index
    %0 = vector.load %arg0[%c0, %c0_0] : memref<64x1xi32, #tpu.memory_space<vmem>>, vector<64x1xi32>
    %1 = tpu.iota {dimensions = array<i32: 1>} : vector<64x128xi32>
    %2 = vector.broadcast %0 : vector<64x1xi32> to vector<64x128xi32>
    %3 = arith.cmpi eq, %1, %2 : vector<64x128xi32>
    %4 = arith.extui %3 : vector<64x128xi1> to vector<64x128xi32>
    %5 = arith.sitofp %4 : vector<64x128xi32> to vector<64x128xf32>
    %c0_1 = arith.constant 0 : index
    %c0_2 = arith.constant 0 : index
    %6 = vector.load %arg1[%c0_1, %c0_2] : memref<128x128xf32, #tpu.memory_space<vmem>>, vector<128x128xf32>
    %cst = arith.constant dense<0.000000e+00> : vector<64x128xf32>
    %7 = tpu.matmul %5, %6, %cst {dimension_numbers = #tpu.dot_dimension_numbers<[1], [0], [0], [1], [0, 0, 1, 1], [], []>} : vector<64x128xf32>, vector<128x128xf32>, vector<64x128xf32> -> vector<64x128xf32>
    %c0_3 = arith.constant 0 : index
    %c0_4 = arith.constant 0 : index
    %8 = vector.load %arg4[%c0_3, %c0_4] : memref<64x128xf32, #tpu.memory_space<vmem>>, vector<64x128xf32>
    tpu.vector_store %arg4[%c0_3, %c0_4], %7 {strides = array<i32>} : memref<64x128xf32, #tpu.memory_space<vmem>>, vector<64x128xf32>,
    %c0_5 = arith.constant 0 : index
    %c0_6 = arith.constant 0 : index
    %9 = vector.load %arg2[%c0_5, %c0_6] : memref<32x128xf32, #tpu.memory_space<vmem>>, vector<32x128xf32>
    %10 = tpu.iota {dimensions = array<i32: 1>} : vector<1x128xi32>
    %c96_i32 = arith.constant 96 : i32
    %11 = vector.broadcast %c96_i32 : i32 to vector<1x128xi32>
    %12 = arith.cmpi slt, %10, %11 : vector<1x128xi32>
    %cst_7 = arith.constant 5.000000e-01 : f32
    %cst_8 = arith.constant 1.000000e+00 : f32
    %13 = vector.broadcast %cst_7 : f32 to vector<1x128xf32>
    %14 = vector.broadcast %cst_8 : f32 to vector<1x128xf32>
    %15 = arith.select %12, %13, %14 : vector<1x128xi1>, vector<1x128xf32>
    %16 = vector.shape_cast %15 : vector<1x128xf32> to vector<1x128xf32>
    %17 = vector.broadcast %16 : vector<1x128xf32> to vector<8x128xf32>
    %cst_9 = arith.constant 0.000000e+00 : f32
    %18 = vector.broadcast %cst_9 : f32 to vector<8x32xf32>
    %cst_10 = arith.constant 0.000000e+00 : f32
    %19 = vector.broadcast %cst_10 : f32 to vector<8x32xf32>
    %c0_i32 = arith.constant 0 : i32
    %c8_i32 = arith.constant 8 : i32
    %20 = arith.muli %c0_i32, %c8_i32 : i32
    %21 = tpu.assume_multiple %20, 8 : i32
    %22 = arith.index_cast %21 : i32 to index
    %c0_11 = arith.constant 0 : index
    %23 = vector.load %arg4[%22, %c0_11] : memref<64x128xf32, #tpu.memory_space<vmem>>, vector<8x128xf32>
    %cst_12 = arith.constant dense<0.000000e+00> : vector<8x128xf32>
    %24 = tpu.matmul %18, %9, %cst_12 {dimension_numbers = #tpu.dot_dimension_numbers<[1], [0], [0], [1], [0, 0, 1, 1], [], []>} : vector<8x32xf32>, vector<32x128xf32>, vector<8x128xf32> -> vector<8x128xf32>
    %25 = arith.addf %23, %24 : vector<8x128xf32>
    %26 = arith.mulf %25, %17 : vector<8x128xf32>
    %27 = math.tanh %26 : vector<8x128xf32>
    %28 = vector.extract_strided_slice %27 {offsets = [0, 0], sizes = [8, 96], strides = [1, 1]} : vector<8x128xf32> to vector<8x96xf32>
    %cst_13 = arith.constant 1.000000e+00 : f32
    %29 = vector.broadcast %cst_13 : f32 to vector<8x96xf32>
    %30 = arith.addf %28, %29 : vector<8x96xf32>
    %cst_14 = arith.constant 5.000000e-01 : f32
    %31 = vector.broadcast %cst_14 : f32 to vector<8x96xf32>
    %32 = arith.mulf %31, %30 : vector<8x96xf32>
    %33 = vector.extract_strided_slice %32 {offsets = [0, 0], sizes = [8, 32], strides = [1, 1]} : vector<8x96xf32> to vector<8x32xf32>
    %34 = vector.extract_strided_slice %32 {offsets = [0, 32], sizes = [8, 32], strides = [1, 1]} : vector<8x96xf32> to vector<8x32xf32>
    %35 = vector.extract_strided_slice %32 {offsets = [0, 64], sizes = [8, 32], strides = [1, 1]} : vector<8x96xf32> to vector<8x32xf32>
    %36 = vector.extract_strided_slice %27 {offsets = [0, 96], sizes = [8, 32], strides = [1, 1]} : vector<8x128xf32> to vector<8x32xf32>
    %37 = arith.mulf %34, %19 : vector<8x32xf32>
    %38 = arith.mulf %33, %36 : vector<8x32xf32>
    %39 = arith.addf %37, %38 : vector<8x32xf32>
    %40 = math.tanh %39 : vector<8x32xf32>
    %41 = arith.mulf %35, %40 : vector<8x32xf32>
    %c1_i32 = arith.constant 1 : i32
    %c8_i32_15 = arith.constant 8 : i32
    %42 = arith.muli %c1_i32, %c8_i32_15 : i32
    %43 = tpu.assume_multiple %42, 8 : i32
    %44 = arith.index_cast %43 : i32 to index
    %c0_16 = arith.constant 0 : index
    %45 = vector.load %arg4[%44, %c0_16] : memref<64x128xf32, #tpu.memory_space<vmem>>, vector<8x128xf32>
    %cst_17 = arith.constant dense<0.000000e+00> : vector<8x128xf32>
    %46 = tpu.matmul %41, %9, %cst_17 {dimension_numbers = #tpu.dot_dimension_numbers<[1], [0], [0], [1], [0, 0, 1, 1], [], []>} : vector<8x32xf32>, vector<32x128xf32>, vector<8x128xf32> -> vector<8x128xf32>
    %47 = arith.addf %45, %46 : vector<8x128xf32>
    %48 = arith.mulf %47, %17 : vector<8x128xf32>
    %49 = math.tanh %48 : vector<8x128xf32>
    %50 = vector.extract_strided_slice %49 {offsets = [0, 0], sizes = [8, 96], strides = [1, 1]} : vector<8x128xf32> to vector<8x96xf32>
    %cst_18 = arith.constant 1.000000e+00 : f32
    %51 = vector.broadcast %cst_18 : f32 to vector<8x96xf32>
    %52 = arith.addf %50, %51 : vector<8x96xf32>
    %cst_19 = arith.constant 5.000000e-01 : f32
    %53 = vector.broadcast %cst_19 : f32 to vector<8x96xf32>
    %54 = arith.mulf %53, %52 : vector<8x96xf32>
    %55 = vector.extract_strided_slice %54 {offsets = [0, 0], sizes = [8, 32], strides = [1, 1]} : vector<8x96xf32> to vector<8x32xf32>
    %56 = vector.extract_strided_slice %54 {offsets = [0, 32], sizes = [8, 32], strides = [1, 1]} : vector<8x96xf32> to vector<8x32xf32>
    %57 = vector.extract_strided_slice %54 {offsets = [0, 64], sizes = [8, 32], strides = [1, 1]} : vector<8x96xf32> to vector<8x32xf32>
    %58 = vector.extract_strided_slice %49 {offsets = [0, 96], sizes = [8, 32], strides = [1, 1]} : vector<8x128xf32> to vector<8x32xf32>
    %59 = arith.mulf %56, %39 : vector<8x32xf32>
    %60 = arith.mulf %55, %58 : vector<8x32xf32>
    %61 = arith.addf %59, %60 : vector<8x32xf32>
    %62 = math.tanh %61 : vector<8x32xf32>
    %63 = arith.mulf %57, %62 : vector<8x32xf32>
    %c2_i32 = arith.constant 2 : i32
    %c8_i32_20 = arith.constant 8 : i32
    %64 = arith.muli %c2_i32, %c8_i32_20 : i32
    %65 = tpu.assume_multiple %64, 8 : i32
    %66 = arith.index_cast %65 : i32 to index
    %c0_21 = arith.constant 0 : index
    %67 = vector.load %arg4[%66, %c0_21] : memref<64x128xf32, #tpu.memory_space<vmem>>, vector<8x128xf32>
    %cst_22 = arith.constant dense<0.000000e+00> : vector<8x128xf32>
    %68 = tpu.matmul %63, %9, %cst_22 {dimension_numbers = #tpu.dot_dimension_numbers<[1], [0], [0], [1], [0, 0, 1, 1], [], []>} : vector<8x32xf32>, vector<32x128xf32>, vector<8x128xf32> -> vector<8x128xf32>
    %69 = arith.addf %67, %68 : vector<8x128xf32>
    %70 = arith.mulf %69, %17 : vector<8x128xf32>
    %71 = math.tanh %70 : vector<8x128xf32>
    %72 = vector.extract_strided_slice %71 {offsets = [0, 0], sizes = [8, 96], strides = [1, 1]} : vector<8x128xf32> to vector<8x96xf32>
    %cst_23 = arith.constant 1.000000e+00 : f32
    %73 = vector.broadcast %cst_23 : f32 to vector<8x96xf32>
    %74 = arith.addf %72, %73 : vector<8x96xf32>
    %cst_24 = arith.constant 5.000000e-01 : f32
    %75 = vector.broadcast %cst_24 : f32 to vector<8x96xf32>
    %76 = arith.mulf %75, %74 : vector<8x96xf32>
    %77 = vector.extract_strided_slice %76 {offsets = [0, 0], sizes = [8, 32], strides = [1, 1]} : vector<8x96xf32> to vector<8x32xf32>
    %78 = vector.extract_strided_slice %76 {offsets = [0, 32], sizes = [8, 32], strides = [1, 1]} : vector<8x96xf32> to vector<8x32xf32>
    %79 = vector.extract_strided_slice %76 {offsets = [0, 64], sizes = [8, 32], strides = [1, 1]} : vector<8x96xf32> to vector<8x32xf32>
    %80 = vector.extract_strided_slice %71 {offsets = [0, 96], sizes = [8, 32], strides = [1, 1]} : vector<8x128xf32> to vector<8x32xf32>
    %81 = arith.mulf %78, %61 : vector<8x32xf32>
    %82 = arith.mulf %77, %80 : vector<8x32xf32>
    %83 = arith.addf %81, %82 : vector<8x32xf32>
    %84 = math.tanh %83 : vector<8x32xf32>
    %85 = arith.mulf %79, %84 : vector<8x32xf32>
    %c3_i32 = arith.constant 3 : i32
    %c8_i32_25 = arith.constant 8 : i32
    %86 = arith.muli %c3_i32, %c8_i32_25 : i32
    %87 = tpu.assume_multiple %86, 8 : i32
    %88 = arith.index_cast %87 : i32 to index
    %c0_26 = arith.constant 0 : index
    %89 = vector.load %arg4[%88, %c0_26] : memref<64x128xf32, #tpu.memory_space<vmem>>, vector<8x128xf32>
    %cst_27 = arith.constant dense<0.000000e+00> : vector<8x128xf32>
    %90 = tpu.matmul %85, %9, %cst_27 {dimension_numbers = #tpu.dot_dimension_numbers<[1], [0], [0], [1], [0, 0, 1, 1], [], []>} : vector<8x32xf32>, vector<32x128xf32>, vector<8x128xf32> -> vector<8x128xf32>
    %91 = arith.addf %89, %90 : vector<8x128xf32>
    %92 = arith.mulf %91, %17 : vector<8x128xf32>
    %93 = math.tanh %92 : vector<8x128xf32>
    %94 = vector.extract_strided_slice %93 {offsets = [0, 0], sizes = [8, 96], strides = [1, 1]} : vector<8x128xf32> to vector<8x96xf32>
    %cst_28 = arith.constant 1.000000e+00 : f32
    %95 = vector.broadcast %cst_28 : f32 to vector<8x96xf32>
    %96 = arith.addf %94, %95 : vector<8x96xf32>
    %cst_29 = arith.constant 5.000000e-01 : f32
    %97 = vector.broadcast %cst_29 : f32 to vector<8x96xf32>
    %98 = arith.mulf %97, %96 : vector<8x96xf32>
    %99 = vector.extract_strided_slice %98 {offsets = [0, 0], sizes = [8, 32], strides = [1, 1]} : vector<8x96xf32> to vector<8x32xf32>
    %100 = vector.extract_strided_slice %98 {offsets = [0, 32], sizes = [8, 32], strides = [1, 1]} : vector<8x96xf32> to vector<8x32xf32>
    %101 = vector.extract_strided_slice %98 {offsets = [0, 64], sizes = [8, 32], strides = [1, 1]} : vector<8x96xf32> to vector<8x32xf32>
    %102 = vector.extract_strided_slice %93 {offsets = [0, 96], sizes = [8, 32], strides = [1, 1]} : vector<8x128xf32> to vector<8x32xf32>
    %103 = arith.mulf %100, %83 : vector<8x32xf32>
    %104 = arith.mulf %99, %102 : vector<8x32xf32>
    %105 = arith.addf %103, %104 : vector<8x32xf32>
    %106 = math.tanh %105 : vector<8x32xf32>
    %107 = arith.mulf %101, %106 : vector<8x32xf32>
    %c4_i32 = arith.constant 4 : i32
    %c8_i32_30 = arith.constant 8 : i32
    %108 = arith.muli %c4_i32, %c8_i32_30 : i32
    %109 = tpu.assume_multiple %108, 8 : i32
    %110 = arith.index_cast %109 : i32 to index
    %c0_31 = arith.constant 0 : index
    %111 = vector.load %arg4[%110, %c0_31] : memref<64x128xf32, #tpu.memory_space<vmem>>, vector<8x128xf32>
    %cst_32 = arith.constant dense<0.000000e+00> : vector<8x128xf32>
    %112 = tpu.matmul %107, %9, %cst_32 {dimension_numbers = #tpu.dot_dimension_numbers<[1], [0], [0], [1], [0, 0, 1, 1], [], []>} : vector<8x32xf32>, vector<32x128xf32>, vector<8x128xf32> -> vector<8x128xf32>
    %113 = arith.addf %111, %112 : vector<8x128xf32>
    %114 = arith.mulf %113, %17 : vector<8x128xf32>
    %115 = math.tanh %114 : vector<8x128xf32>
    %116 = vector.extract_strided_slice %115 {offsets = [0, 0], sizes = [8, 96], strides = [1, 1]} : vector<8x128xf32> to vector<8x96xf32>
    %cst_33 = arith.constant 1.000000e+00 : f32
    %117 = vector.broadcast %cst_33 : f32 to vector<8x96xf32>
    %118 = arith.addf %116, %117 : vector<8x96xf32>
    %cst_34 = arith.constant 5.000000e-01 : f32
    %119 = vector.broadcast %cst_34 : f32 to vector<8x96xf32>
    %120 = arith.mulf %119, %118 : vector<8x96xf32>
    %121 = vector.extract_strided_slice %120 {offsets = [0, 0], sizes = [8, 32], strides = [1, 1]} : vector<8x96xf32> to vector<8x32xf32>
    %122 = vector.extract_strided_slice %120 {offsets = [0, 32], sizes = [8, 32], strides = [1, 1]} : vector<8x96xf32> to vector<8x32xf32>
    %123 = vector.extract_strided_slice %120 {offsets = [0, 64], sizes = [8, 32], strides = [1, 1]} : vector<8x96xf32> to vector<8x32xf32>
    %124 = vector.extract_strided_slice %115 {offsets = [0, 96], sizes = [8, 32], strides = [1, 1]} : vector<8x128xf32> to vector<8x32xf32>
    %125 = arith.mulf %122, %105 : vector<8x32xf32>
    %126 = arith.mulf %121, %124 : vector<8x32xf32>
    %127 = arith.addf %125, %126 : vector<8x32xf32>
    %128 = math.tanh %127 : vector<8x32xf32>
    %129 = arith.mulf %123, %128 : vector<8x32xf32>
    %c5_i32 = arith.constant 5 : i32
    %c8_i32_35 = arith.constant 8 : i32
    %130 = arith.muli %c5_i32, %c8_i32_35 : i32
    %131 = tpu.assume_multiple %130, 8 : i32
    %132 = arith.index_cast %131 : i32 to index
    %c0_36 = arith.constant 0 : index
    %133 = vector.load %arg4[%132, %c0_36] : memref<64x128xf32, #tpu.memory_space<vmem>>, vector<8x128xf32>
    %cst_37 = arith.constant dense<0.000000e+00> : vector<8x128xf32>
    %134 = tpu.matmul %129, %9, %cst_37 {dimension_numbers = #tpu.dot_dimension_numbers<[1], [0], [0], [1], [0, 0, 1, 1], [], []>} : vector<8x32xf32>, vector<32x128xf32>, vector<8x128xf32> -> vector<8x128xf32>
    %135 = arith.addf %133, %134 : vector<8x128xf32>
    %136 = arith.mulf %135, %17 : vector<8x128xf32>
    %137 = math.tanh %136 : vector<8x128xf32>
    %138 = vector.extract_strided_slice %137 {offsets = [0, 0], sizes = [8, 96], strides = [1, 1]} : vector<8x128xf32> to vector<8x96xf32>
    %cst_38 = arith.constant 1.000000e+00 : f32
    %139 = vector.broadcast %cst_38 : f32 to vector<8x96xf32>
    %140 = arith.addf %138, %139 : vector<8x96xf32>
    %cst_39 = arith.constant 5.000000e-01 : f32
    %141 = vector.broadcast %cst_39 : f32 to vector<8x96xf32>
    %142 = arith.mulf %141, %140 : vector<8x96xf32>
    %143 = vector.extract_strided_slice %142 {offsets = [0, 0], sizes = [8, 32], strides = [1, 1]} : vector<8x96xf32> to vector<8x32xf32>
    %144 = vector.extract_strided_slice %142 {offsets = [0, 32], sizes = [8, 32], strides = [1, 1]} : vector<8x96xf32> to vector<8x32xf32>
    %145 = vector.extract_strided_slice %142 {offsets = [0, 64], sizes = [8, 32], strides = [1, 1]} : vector<8x96xf32> to vector<8x32xf32>
    %146 = vector.extract_strided_slice %137 {offsets = [0, 96], sizes = [8, 32], strides = [1, 1]} : vector<8x128xf32> to vector<8x32xf32>
    %147 = arith.mulf %144, %127 : vector<8x32xf32>
    %148 = arith.mulf %143, %146 : vector<8x32xf32>
    %149 = arith.addf %147, %148 : vector<8x32xf32>
    %150 = math.tanh %149 : vector<8x32xf32>
    %151 = arith.mulf %145, %150 : vector<8x32xf32>
    %c6_i32 = arith.constant 6 : i32
    %c8_i32_40 = arith.constant 8 : i32
    %152 = arith.muli %c6_i32, %c8_i32_40 : i32
    %153 = tpu.assume_multiple %152, 8 : i32
    %154 = arith.index_cast %153 : i32 to index
    %c0_41 = arith.constant 0 : index
    %155 = vector.load %arg4[%154, %c0_41] : memref<64x128xf32, #tpu.memory_space<vmem>>, vector<8x128xf32>
    %cst_42 = arith.constant dense<0.000000e+00> : vector<8x128xf32>
    %156 = tpu.matmul %151, %9, %cst_42 {dimension_numbers = #tpu.dot_dimension_numbers<[1], [0], [0], [1], [0, 0, 1, 1], [], []>} : vector<8x32xf32>, vector<32x128xf32>, vector<8x128xf32> -> vector<8x128xf32>
    %157 = arith.addf %155, %156 : vector<8x128xf32>
    %158 = arith.mulf %157, %17 : vector<8x128xf32>
    %159 = math.tanh %158 : vector<8x128xf32>
    %160 = vector.extract_strided_slice %159 {offsets = [0, 0], sizes = [8, 96], strides = [1, 1]} : vector<8x128xf32> to vector<8x96xf32>
    %cst_43 = arith.constant 1.000000e+00 : f32
    %161 = vector.broadcast %cst_43 : f32 to vector<8x96xf32>
    %162 = arith.addf %160, %161 : vector<8x96xf32>
    %cst_44 = arith.constant 5.000000e-01 : f32
    %163 = vector.broadcast %cst_44 : f32 to vector<8x96xf32>
    %164 = arith.mulf %163, %162 : vector<8x96xf32>
    %165 = vector.extract_strided_slice %164 {offsets = [0, 0], sizes = [8, 32], strides = [1, 1]} : vector<8x96xf32> to vector<8x32xf32>
    %166 = vector.extract_strided_slice %164 {offsets = [0, 32], sizes = [8, 32], strides = [1, 1]} : vector<8x96xf32> to vector<8x32xf32>
    %167 = vector.extract_strided_slice %164 {offsets = [0, 64], sizes = [8, 32], strides = [1, 1]} : vector<8x96xf32> to vector<8x32xf32>
    %168 = vector.extract_strided_slice %159 {offsets = [0, 96], sizes = [8, 32], strides = [1, 1]} : vector<8x128xf32> to vector<8x32xf32>
    %169 = arith.mulf %166, %149 : vector<8x32xf32>
    %170 = arith.mulf %165, %168 : vector<8x32xf32>
    %171 = arith.addf %169, %170 : vector<8x32xf32>
    %172 = math.tanh %171 : vector<8x32xf32>
    %173 = arith.mulf %167, %172 : vector<8x32xf32>
    %c7_i32 = arith.constant 7 : i32
    %c8_i32_45 = arith.constant 8 : i32
    %174 = arith.muli %c7_i32, %c8_i32_45 : i32
    %175 = tpu.assume_multiple %174, 8 : i32
    %176 = arith.index_cast %175 : i32 to index
    %c0_46 = arith.constant 0 : index
    %177 = vector.load %arg4[%176, %c0_46] : memref<64x128xf32, #tpu.memory_space<vmem>>, vector<8x128xf32>
    %cst_47 = arith.constant dense<0.000000e+00> : vector<8x128xf32>
    %178 = tpu.matmul %173, %9, %cst_47 {dimension_numbers = #tpu.dot_dimension_numbers<[1], [0], [0], [1], [0, 0, 1, 1], [], []>} : vector<8x32xf32>, vector<32x128xf32>, vector<8x128xf32> -> vector<8x128xf32>
    %179 = arith.addf %177, %178 : vector<8x128xf32>
    %180 = arith.mulf %179, %17 : vector<8x128xf32>
    %181 = math.tanh %180 : vector<8x128xf32>
    %182 = vector.extract_strided_slice %181 {offsets = [0, 0], sizes = [8, 96], strides = [1, 1]} : vector<8x128xf32> to vector<8x96xf32>
    %cst_48 = arith.constant 1.000000e+00 : f32
    %183 = vector.broadcast %cst_48 : f32 to vector<8x96xf32>
    %184 = arith.addf %182, %183 : vector<8x96xf32>
    %cst_49 = arith.constant 5.000000e-01 : f32
    %185 = vector.broadcast %cst_49 : f32 to vector<8x96xf32>
    %186 = arith.mulf %185, %184 : vector<8x96xf32>
    %187 = vector.extract_strided_slice %186 {offsets = [0, 0], sizes = [8, 32], strides = [1, 1]} : vector<8x96xf32> to vector<8x32xf32>
    %188 = vector.extract_strided_slice %186 {offsets = [0, 32], sizes = [8, 32], strides = [1, 1]} : vector<8x96xf32> to vector<8x32xf32>
    %189 = vector.extract_strided_slice %186 {offsets = [0, 64], sizes = [8, 32], strides = [1, 1]} : vector<8x96xf32> to vector<8x32xf32>
    %190 = vector.extract_strided_slice %181 {offsets = [0, 96], sizes = [8, 32], strides = [1, 1]} : vector<8x128xf32> to vector<8x32xf32>
    %191 = arith.mulf %188, %171 : vector<8x32xf32>
    %192 = arith.mulf %187, %190 : vector<8x32xf32>
    %193 = arith.addf %191, %192 : vector<8x32xf32>
    %194 = math.tanh %193 : vector<8x32xf32>
    %195 = arith.mulf %189, %194 : vector<8x32xf32>
    %c8_i32_50 = arith.constant 8 : i32
    %c0_51 = arith.constant 0 : index
    %c0_52 = arith.constant 0 : index
    %196 = vector.load %arg3[%c0_51, %c0_52] : memref<8x32xf32, #tpu.memory_space<vmem>>, vector<8x32xf32>
    tpu.vector_store %arg3[%c0_51, %c0_52], %195 {strides = array<i32>} : memref<8x32xf32, #tpu.memory_space<vmem>>, vector<8x32xf32>,
    return
  }
}

</mosaic_0001>

<llo_original>
// kernel: _lambda_.1
$region0: #{_lambda_.1}
  #allocation0 [shape = 'u32[]', space=smem, size = 0x4, offset = 0x4, fixed_abs, tag = 'smem constant byte address 0x4 - core index']
  #allocation1 [shape = 'u32[72,128]{1,0:T(1,128)}', space=vmem, size = 0x9000, scoped, tag = 'internal scratch']
  #allocation2 [shape = 'f32[64,128]{1,0:T(8,128)}', space=vmem, size = 0x8000, scoped, tag = 'scratch operand']
  %s0 = inlined_call_operand.vmem [shape: s32[64,1], index: 0, kind: input, shape index: {}]
  %s1 = inlined_call_operand.hbm [shape: f32[128,128], index: 1, kind: input, shape index: {}]
  %s2 = inlined_call_operand.vmem [shape: f32[32,128], index: 2, kind: input, shape index: {}]
  %s3 = inlined_call_operand.vmem [shape: f32[8,32], index: 3, kind: output, shape index: {}]
  %s4 = sld [smem:[#allocation0]]
  $region26: #{_lambda_.1} parent=0
    _
  %s6 = ssub.s32 1, %s4
  %s7 = scalar_select 0, %s6, %s4
  $region1: #{_lambda_.1} parent=0
    #allocation3 [shape = 'u8[65536]{0}', space=vmem, size = 0x10000, scoped, tag = 'input window, operand 1, single buffered']
    #allocation4 [shape = 's32[1]{0}', space=sflag, size = 0x4, scoped, tag = 'scoped memory for _lambda_.1']
    %8 = vsyncpa [#allocation4], 0
    // Predicated region
    $region2: #{_lambda_.1} parent=1 // pred_check
      _
    $region3: #{_lambda_.1} parent=1 // pred_check_branch
      %10 = sbr.rel (0) target = $region5
    $region4: #{_lambda_.1} parent=1 // pred_region
      _
    $region5: #{_lambda_.1} parent=1 // pred_fallthru
      _
    // Predicated region
    $region6: #{_lambda_.1} parent=1 // pred_check
      _
    $region7: #{_lambda_.1} parent=1 // pred_check_branch
      %12 = sbr.rel (0) target = $region9
    $region8: #{_lambda_.1} parent=1 // pred_region
      %14 = vsyncadd [#allocation4], 0
      %s15 = sshll.u32 %s1, 4
      %s16 = int_to_ptr.hbm [resolvable:$true] %s15
      %s17 = sshll.u32 [#allocation3], 4
      %s18 = int_to_ptr.vmem [resolvable:$true] %s17
      %23 = dma.hbm_to_vmem [thread:$0]  %s16, 2048, %s18, [#allocation4], 128, 128, 8
    $region9: #{_lambda_.1} parent=1 // pred_fallthru
      _
    // Predicated region
    $region10: #{_lambda_.1} parent=1 // pred_check
      _
    $region11: #{_lambda_.1} parent=1 // pred_check_branch
      %25 = sbr.rel (0) target = $region13
    $region12: #{_lambda_.1} parent=1 // pred_region
      _
    $region13: #{_lambda_.1} parent=1 // pred_fallthru
      _
    // Predicated region
    $region14: #{_lambda_.1} parent=1 // pred_check
      _
    $region15: #{_lambda_.1} parent=1 // pred_check_branch
      %27 = sbr.rel (0) target = $region17
    $region16: #{_lambda_.1} parent=1 // pred_region
      %29 = dma.done [#allocation4], 2048
    $region17: #{_lambda_.1} parent=1 // pred_fallthru
      _
    %v30 = vld [vmem:[%s0] sm:$0xff]
    %v31 = vld [vmem:[%s0 + $0x8] sm:$0xff]
    %v32 = vld [vmem:[%s0 + $0x10] sm:$0xff]
    %v33 = vld [vmem:[%s0 + $0x18] sm:$0xff]
    %v34 = vld [vmem:[%s0 + $0x20] sm:$0xff]
    %v35 = vld [vmem:[%s0 + $0x28] sm:$0xff]
    %v36 = vld [vmem:[%s0 + $0x30] sm:$0xff]
    %v37 = vld [vmem:[%s0 + $0x38] sm:$0xff]
    %v38 = vlaneseq
    %v39 = vand.u32 %v38, 127
    %40 = vset.pattern.permute.xlu0 0
    %41 = vperm.xlu0 %40, %v30
    %v42 = vpop.permute.xlu0 %41
    %43 = vset.pattern.permute.xlu0 0
    %44 = vperm.xlu0 %43, %v31
    %v45 = vpop.permute.xlu0 %44
    %46 = vset.pattern.permute.xlu0 0
    %47 = vperm.xlu0 %46, %v32
    %v48 = vpop.permute.xlu0 %47
    %49 = vset.pattern.permute.xlu0 0
    %50 = vperm.xlu0 %49, %v33
    %v51 = vpop.permute.xlu0 %50
    %52 = vset.pattern.permute.xlu0 0
    %53 = vperm.xlu0 %52, %v34
    %v54 = vpop.permute.xlu0 %53
    %55 = vset.pattern.permute.xlu0 0
    %56 = vperm.xlu0 %55, %v35
    %v57 = vpop.permute.xlu0 %56
    %58 = vset.pattern.permute.xlu0 0
    %59 = vperm.xlu0 %58, %v36
    %v60 = vpop.permute.xlu0 %59
    %61 = vset.pattern.permute.xlu0 0
    %62 = vperm.xlu0 %61, %v37
    %v63 = vpop.permute.xlu0 %62
    %vm64 = vcmp.eq.s32.totalorder %v39, %v42
    %vm65 = vcmp.eq.s32.totalorder %v39, %v45
    %vm66 = vcmp.eq.s32.totalorder %v39, %v48
    %vm67 = vcmp.eq.s32.totalorder %v39, %v51
    %vm68 = vcmp.eq.s32.totalorder %v39, %v54
    %vm69 = vcmp.eq.s32.totalorder %v39, %v57
    %vm70 = vcmp.eq.s32.totalorder %v39, %v60
    %vm71 = vcmp.eq.s32.totalorder %v39, %v63
    %v72 = vsel %vm64, 1, 0
    %v73 = vsel %vm65, 1, 0
    %v74 = vsel %vm66, 1, 0
    %v75 = vsel %vm67, 1, 0
    %v76 = vsel %vm68, 1, 0
    %v77 = vsel %vm69, 1, 0
    %v78 = vsel %vm70, 1, 0
    %v79 = vsel %vm71, 1, 0
    %v80 = vcvt.s32.f32 %v72
    %v81 = vcvt.s32.f32 %v73
    %v82 = vcvt.s32.f32 %v74
    %v83 = vcvt.s32.f32 %v75
    %v84 = vcvt.s32.f32 %v76
    %v85 = vcvt.s32.f32 %v77
    %v86 = vcvt.s32.f32 %v78
    %v87 = vcvt.s32.f32 %v79
    %v88 = vld [vmem:[#allocation3] sm:$0xff]
    %v89 = vld [vmem:[#allocation3 + $0x8] sm:$0xff]
    %v90 = vld [vmem:[#allocation3 + $0x10] sm:$0xff]
    %v91 = vld [vmem:[#allocation3 + $0x18] sm:$0xff]
    %v92 = vld [vmem:[#allocation3 + $0x20] sm:$0xff]
    %v93 = vld [vmem:[#allocation3 + $0x28] sm:$0xff]
    %v94 = vld [vmem:[#allocation3 + $0x30] sm:$0xff]
    %v95 = vld [vmem:[#allocation3 + $0x38] sm:$0xff]
    %v96 = vld [vmem:[#allocation3 + $0x40] sm:$0xff]
    %v97 = vld [vmem:[#allocation3 + $0x48] sm:$0xff]
    %v98 = vld [vmem:[#allocation3 + $0x50] sm:$0xff]
    %v99 = vld [vmem:[#allocation3 + $0x58] sm:$0xff]
    %v100 = vld [vmem:[#allocation3 + $0x60] sm:$0xff]
    %v101 = vld [vmem:[#allocation3 + $0x68] sm:$0xff]
    %v102 = vld [vmem:[#allocation3 + $0x70] sm:$0xff]
    %v103 = vld [vmem:[#allocation3 + $0x78] sm:$0xff]
    %104 = vmatpush.msra.mxu0 %v103
    %105 = vmatpush.msra.mxu0 %v102
    %106 = vmatpush.msra.mxu0 %v101
    %107 = vmatpush.msra.mxu0 %v100
    %108 = vmatpush.msra.mxu0 %v99
    %109 = vmatpush.msra.mxu0 %v98
    %110 = vmatpush.msra.mxu0 %v97
    %111 = vmatpush.msra.mxu0 %v96
    %112 = vmatpush.msra.mxu0 %v95
    %113 = vmatpush.msra.mxu0 %v94
    %114 = vmatpush.msra.mxu0 %v93
    %115 = vmatpush.msra.mxu0 %v92
    %116 = vmatpush.msra.mxu0 %v91
    %117 = vmatpush.msra.mxu0 %v90
    %118 = vmatpush.msra.mxu0 %v89
    %119 = vmatpush.msra.mxu0 %v88
    %120 = vmatmul.f32.gmra.mxu0 %v80
    %v121 = vpop.f32.mrf.mxu0
    %v122 = vadd.f32 0.0, %v121
    %123 = vmatmul.f32.gmra.mxu0 %v81
    %v124 = vpop.f32.mrf.mxu0
    %v125 = vadd.f32 0.0, %v124
    %126 = vmatmul.f32.gmra.mxu0 %v82
    %v127 = vpop.f32.mrf.mxu0
    %v128 = vadd.f32 0.0, %v127
    %129 = vmatmul.f32.gmra.mxu0 %v83
    %v130 = vpop.f32.mrf.mxu0
    %v131 = vadd.f32 0.0, %v130
    %132 = vmatmul.f32.gmra.mxu0 %v84
    %v133 = vpop.f32.mrf.mxu0
    %v134 = vadd.f32 0.0, %v133
    %135 = vmatmul.f32.gmra.mxu0 %v85
    %v136 = vpop.f32.mrf.mxu0
    %v137 = vadd.f32 0.0, %v136
    %138 = vmatmul.f32.gmra.mxu0 %v86
    %v139 = vpop.f32.mrf.mxu0
    %v140 = vadd.f32 0.0, %v139
    %141 = vmatmul.f32.gmra.mxu0 %v87
    %v142 = vpop.f32.mrf.mxu0
    %v143 = vadd.f32 0.0, %v142
    %144 = vdwg.mxu0
    %145 = vst [vmem:[#allocation2] sm:$0xff] %v122
    %146 = vst [vmem:[#allocation2 + $0x8] sm:$0xff] %v125
    %147 = vst [vmem:[#allocation2 + $0x10] sm:$0xff] %v128
    %148 = vst [vmem:[#allocation2 + $0x18] sm:$0xff] %v131
    %149 = vst [vmem:[#allocation2 + $0x20] sm:$0xff] %v134
    %150 = vst [vmem:[#allocation2 + $0x28] sm:$0xff] %v137
    %151 = vst [vmem:[#allocation2 + $0x30] sm:$0xff] %v140
    %152 = vst [vmem:[#allocation2 + $0x38] sm:$0xff] %v143
    %v153 = vld [vmem:[%s2] sm:$0xff]
    %v154 = vld [vmem:[%s2 + $0x8] sm:$0xff]
    %v155 = vld [vmem:[%s2 + $0x10] sm:$0xff]
    %v156 = vld [vmem:[%s2 + $0x18] sm:$0xff]
    %vm157 = vcmp.lt.s32.totalorder %v39, 96
    %v158 = vsel %vm157, 0.5, 1.0
    %v159 = vld [vmem:[#allocation2] sm:$0xff]
    %vm160 = vcmask 261120
    %v162 = vsel %vm160, 0.0, 0
    %164 = vmatpush.msra.mxu0 0.0
    %165 = vmatpush.msra.mxu0 0.0
    %166 = vmatpush.msra.mxu0 0.0
    %167 = vmatpush.msra.mxu0 0.0
    %168 = vmatpush.msra.mxu0 0.0
    %169 = vmatpush.msra.mxu0 0.0
    %170 = vmatpush.msra.mxu0 0.0
    %171 = vmatpush.msra.mxu0 0.0
    %172 = vmatpush.msra.mxu0 0.0
    %173 = vmatpush.msra.mxu0 0.0
    %174 = vmatpush.msra.mxu0 0.0
    %175 = vmatpush.msra.mxu0 0.0
    %176 = vmatpush.msra.mxu0 %v156
    %177 = vmatpush.msra.mxu0 %v155
    %178 = vmatpush.msra.mxu0 %v154
    %179 = vmatpush.msra.mxu0 %v153
    %180 = vmatmul.f32.gmra.mxu0 %v162
    %v181 = vpop.f32.mrf.mxu0
    %v182 = vadd.f32 0.0, %v181
    %183 = vdwg.mxu0
    %v184 = vadd.f32 %v159, %v182
    %v185 = vmul.f32 %v184, %v158
    %v186 = vtanh.pop %v185
    %v187 = vadd.f32 %v186, 1.0
    %v188 = vmul.f32 %v187, 0.5
    %v189 = vmul.f32 %v188, 0.0
    %191 = vrot.lane.b32.xlu0 %v186, 32
    %v192 = vpop.permute.xlu0 %191
    %v194 = vmul.f32 %v188, %v192
    %196 = vrot.lane.b32.xlu0 %v194, 32
    %v197 = vpop.permute.xlu0 %196
    %v199 = vadd.f32 %v189, %v197
    %v200 = vtanh.pop %v199
    %202 = vrot.lane.b32.xlu0 %v200, 32
    %v203 = vpop.permute.xlu0 %202
    %v205 = vmul.f32 %v188, %v203
    %s206 = scalar_lea.vmem [#allocation2], 8
    %v207 = vld [vmem:[%s206] sm:$0xff]
    %209 = vrot.lane.b32.xlu0 %v205, 64
    %v210 = vpop.permute.xlu0 %209
    %v211 = vsel %vm160, %v210, 0
    %213 = vmatpush.msra.mxu0 0.0
    %214 = vmatpush.msra.mxu0 0.0
    %215 = vmatpush.msra.mxu0 0.0
    %216 = vmatpush.msra.mxu0 0.0
    %217 = vmatpush.msra.mxu0 0.0
    %218 = vmatpush.msra.mxu0 0.0
    %219 = vmatpush.msra.mxu0 0.0
    %220 = vmatpush.msra.mxu0 0.0
    %221 = vmatpush.msra.mxu0 0.0
    %222 = vmatpush.msra.mxu0 0.0
    %223 = vmatpush.msra.mxu0 0.0
    %224 = vmatpush.msra.mxu0 0.0
    %225 = vmatpush.msra.mxu0 %v156
    %226 = vmatpush.msra.mxu0 %v155
    %227 = vmatpush.msra.mxu0 %v154
    %228 = vmatpush.msra.mxu0 %v153
    %229 = vmatmul.f32.gmra.mxu0 %v211
    %v230 = vpop.f32.mrf.mxu0
    %v231 = vadd.f32 0.0, %v230
    %232 = vdwg.mxu0
    %v233 = vadd.f32 %v207, %v231
    %v234 = vmul.f32 %v233, %v158
    %v235 = vtanh.pop %v234
    %v236 = vadd.f32 %v235, 1.0
    %v237 = vmul.f32 %v236, 0.5
    %v238 = vmul.f32 %v237, %v199
    %240 = vrot.lane.b32.xlu0 %v235, 32
    %v241 = vpop.permute.xlu0 %240
    %v243 = vmul.f32 %v237, %v241
    %245 = vrot.lane.b32.xlu0 %v243, 32
    %v246 = vpop.permute.xlu0 %245
    %v248 = vadd.f32 %v238, %v246
    %v249 = vtanh.pop %v248
    %251 = vrot.lane.b32.xlu0 %v249, 32
    %v252 = vpop.permute.xlu0 %251
    %v254 = vmul.f32 %v237, %v252
    %s255 = scalar_lea.vmem [#allocation2], 16
    %v256 = vld [vmem:[%s255] sm:$0xff]
    %258 = vrot.lane.b32.xlu0 %v254, 64
    %v259 = vpop.permute.xlu0 %258
    %v260 = vsel %vm160, %v259, 0
    %262 = vmatpush.msra.mxu0 0.0
    %263 = vmatpush.msra.mxu0 0.0
    %264 = vmatpush.msra.mxu0 0.0
    %265 = vmatpush.msra.mxu0 0.0
    %266 = vmatpush.msra.mxu0 0.0
    %267 = vmatpush.msra.mxu0 0.0
    %268 = vmatpush.msra.mxu0 0.0
    %269 = vmatpush.msra.mxu0 0.0
    %270 = vmatpush.msra.mxu0 0.0
    %271 = vmatpush.msra.mxu0 0.0
    %272 = vmatpush.msra.mxu0 0.0
    %273 = vmatpush.msra.mxu0 0.0
    %274 = vmatpush.msra.mxu0 %v156
    %275 = vmatpush.msra.mxu0 %v155
    %276 = vmatpush.msra.mxu0 %v154
    %277 = vmatpush.msra.mxu0 %v153
    %278 = vmatmul.f32.gmra.mxu0 %v260
    %v279 = vpop.f32.mrf.mxu0
    %v280 = vadd.f32 0.0, %v279
    %281 = vdwg.mxu0
    %v282 = vadd.f32 %v256, %v280
    %v283 = vmul.f32 %v282, %v158
    %v284 = vtanh.pop %v283
    %v285 = vadd.f32 %v284, 1.0
    %v286 = vmul.f32 %v285, 0.5
    %v287 = vmul.f32 %v286, %v248
    %289 = vrot.lane.b32.xlu0 %v284, 32
    %v290 = vpop.permute.xlu0 %289
    %v292 = vmul.f32 %v286, %v290
    %294 = vrot.lane.b32.xlu0 %v292, 32
    %v295 = vpop.permute.xlu0 %294
    %v297 = vadd.f32 %v287, %v295
    %v298 = vtanh.pop %v297
    %300 = vrot.lane.b32.xlu0 %v298, 32
    %v301 = vpop.permute.xlu0 %300
    %v303 = vmul.f32 %v286, %v301
    %s304 = scalar_lea.vmem [#allocation2], 24
    %v305 = vld [vmem:[%s304] sm:$0xff]
    %307 = vrot.lane.b32.xlu0 %v303, 64
    %v308 = vpop.permute.xlu0 %307
    %v309 = vsel %vm160, %v308, 0
    %311 = vmatpush.msra.mxu0 0.0
    %312 = vmatpush.msra.mxu0 0.0
    %313 = vmatpush.msra.mxu0 0.0
    %314 = vmatpush.msra.mxu0 0.0
    %315 = vmatpush.msra.mxu0 0.0
    %316 = vmatpush.msra.mxu0 0.0
    %317 = vmatpush.msra.mxu0 0.0
    %318 = vmatpush.msra.mxu0 0.0
    %319 = vmatpush.msra.mxu0 0.0
    %320 = vmatpush.msra.mxu0 0.0
    %321 = vmatpush.msra.mxu0 0.0
    %322 = vmatpush.msra.mxu0 0.0
    %323 = vmatpush.msra.mxu0 %v156
    %324 = vmatpush.msra.mxu0 %v155
    %325 = vmatpush.msra.mxu0 %v154
    %326 = vmatpush.msra.mxu0 %v153
    %327 = vmatmul.f32.gmra.mxu0 %v309
    %v328 = vpop.f32.mrf.mxu0
    %v329 = vadd.f32 0.0, %v328
    %330 = vdwg.mxu0
    %v331 = vadd.f32 %v305, %v329
    %v332 = vmul.f32 %v331, %v158
    %v333 = vtanh.pop %v332
    %v334 = vadd.f32 %v333, 1.0
    %v335 = vmul.f32 %v334, 0.5
    %v336 = vmul.f32 %v335, %v297
    %338 = vrot.lane.b32.xlu0 %v333, 32
    %v339 = vpop.permute.xlu0 %338
    %v341 = vmul.f32 %v335, %v339
    %343 = vrot.lane.b32.xlu0 %v341, 32
    %v344 = vpop.permute.xlu0 %343
    %v346 = vadd.f32 %v336, %v344
    %v347 = vtanh.pop %v346
    %349 = vrot.lane.b32.xlu0 %v347, 32
    %v350 = vpop.permute.xlu0 %349
    %v352 = vmul.f32 %v335, %v350
    %s353 = scalar_lea.vmem [#allocation2], 32
    %v354 = vld [vmem:[%s353] sm:$0xff]
    %356 = vrot.lane.b32.xlu0 %v352, 64
    %v357 = vpop.permute.xlu0 %356
    %v358 = vsel %vm160, %v357, 0
    %360 = vmatpush.msra.mxu0 0.0
    %361 = vmatpush.msra.mxu0 0.0
    %362 = vmatpush.msra.mxu0 0.0
    %363 = vmatpush.msra.mxu0 0.0
    %364 = vmatpush.msra.mxu0 0.0
    %365 = vmatpush.msra.mxu0 0.0
    %366 = vmatpush.msra.mxu0 0.0
    %367 = vmatpush.msra.mxu0 0.0
    %368 = vmatpush.msra.mxu0 0.0
    %369 = vmatpush.msra.mxu0 0.0
    %370 = vmatpush.msra.mxu0 0.0
    %371 = vmatpush.msra.mxu0 0.0
    %372 = vmatpush.msra.mxu0 %v156
    %373 = vmatpush.msra.mxu0 %v155
    %374 = vmatpush.msra.mxu0 %v154
    %375 = vmatpush.msra.mxu0 %v153
    %376 = vmatmul.f32.gmra.mxu0 %v358
    %v377 = vpop.f32.mrf.mxu0
    %v378 = vadd.f32 0.0, %v377
    %379 = vdwg.mxu0
    %v380 = vadd.f32 %v354, %v378
    %v381 = vmul.f32 %v380, %v158
    %v382 = vtanh.pop %v381
    %v383 = vadd.f32 %v382, 1.0
    %v384 = vmul.f32 %v383, 0.5
    %v385 = vmul.f32 %v384, %v346
    %387 = vrot.lane.b32.xlu0 %v382, 32
    %v388 = vpop.permute.xlu0 %387
    %v390 = vmul.f32 %v384, %v388
    %392 = vrot.lane.b32.xlu0 %v390, 32
    %v393 = vpop.permute.xlu0 %392
    %v395 = vadd.f32 %v385, %v393
    %v396 = vtanh.pop %v395
    %398 = vrot.lane.b32.xlu0 %v396, 32
    %v399 = vpop.permute.xlu0 %398
    %v401 = vmul.f32 %v384, %v399
    %s402 = scalar_lea.vmem [#allocation2], 40
    %v403 = vld [vmem:[%s402] sm:$0xff]
    %405 = vrot.lane.b32.xlu0 %v401, 64
    %v406 = vpop.permute.xlu0 %405
    %v407 = vsel %vm160, %v406, 0
    %409 = vmatpush.msra.mxu0 0.0
    %410 = vmatpush.msra.mxu0 0.0
    %411 = vmatpush.msra.mxu0 0.0
    %412 = vmatpush.msra.mxu0 0.0
    %413 = vmatpush.msra.mxu0 0.0
    %414 = vmatpush.msra.mxu0 0.0
    %415 = vmatpush.msra.mxu0 0.0
    %416 = vmatpush.msra.mxu0 0.0
    %417 = vmatpush.msra.mxu0 0.0
    %418 = vmatpush.msra.mxu0 0.0
    %419 = vmatpush.msra.mxu0 0.0
    %420 = vmatpush.msra.mxu0 0.0
    %421 = vmatpush.msra.mxu0 %v156
    %422 = vmatpush.msra.mxu0 %v155
    %423 = vmatpush.msra.mxu0 %v154
    %424 = vmatpush.msra.mxu0 %v153
    %425 = vmatmul.f32.gmra.mxu0 %v407
    %v426 = vpop.f32.mrf.mxu0
    %v427 = vadd.f32 0.0, %v426
    %428 = vdwg.mxu0
    %v429 = vadd.f32 %v403, %v427
    %v430 = vmul.f32 %v429, %v158
    %v431 = vtanh.pop %v430
    %v432 = vadd.f32 %v431, 1.0
    %v433 = vmul.f32 %v432, 0.5
    %v434 = vmul.f32 %v433, %v395
    %436 = vrot.lane.b32.xlu0 %v431, 32
    %v437 = vpop.permute.xlu0 %436
    %v439 = vmul.f32 %v433, %v437
    %441 = vrot.lane.b32.xlu0 %v439, 32
    %v442 = vpop.permute.xlu0 %441
    %v444 = vadd.f32 %v434, %v442
    %v445 = vtanh.pop %v444
    %447 = vrot.lane.b32.xlu0 %v445, 32
    %v448 = vpop.permute.xlu0 %447
    %v450 = vmul.f32 %v433, %v448
    %s451 = scalar_lea.vmem [#allocation2], 48
    %v452 = vld [vmem:[%s451] sm:$0xff]
    %454 = vrot.lane.b32.xlu0 %v450, 64
    %v455 = vpop.permute.xlu0 %454
    %v456 = vsel %vm160, %v455, 0
    %458 = vmatpush.msra.mxu0 0.0
    %459 = vmatpush.msra.mxu0 0.0
    %460 = vmatpush.msra.mxu0 0.0
    %461 = vmatpush.msra.mxu0 0.0
    %462 = vmatpush.msra.mxu0 0.0
    %463 = vmatpush.msra.mxu0 0.0
    %464 = vmatpush.msra.mxu0 0.0
    %465 = vmatpush.msra.mxu0 0.0
    %466 = vmatpush.msra.mxu0 0.0
    %467 = vmatpush.msra.mxu0 0.0
    %468 = vmatpush.msra.mxu0 0.0
    %469 = vmatpush.msra.mxu0 0.0
    %470 = vmatpush.msra.mxu0 %v156
    %471 = vmatpush.msra.mxu0 %v155
    %472 = vmatpush.msra.mxu0 %v154
    %473 = vmatpush.msra.mxu0 %v153
    %474 = vmatmul.f32.gmra.mxu0 %v456
    %v475 = vpop.f32.mrf.mxu0
    %v476 = vadd.f32 0.0, %v475
    %477 = vdwg.mxu0
    %v478 = vadd.f32 %v452, %v476
    %v479 = vmul.f32 %v478, %v158
    %v480 = vtanh.pop %v479
    %v481 = vadd.f32 %v480, 1.0
    %v482 = vmul.f32 %v481, 0.5
    %v483 = vmul.f32 %v482, %v444
    %485 = vrot.lane.b32.xlu0 %v480, 32
    %v486 = vpop.permute.xlu0 %485
    %v488 = vmul.f32 %v482, %v486
    %490 = vrot.lane.b32.xlu0 %v488, 32
    %v491 = vpop.permute.xlu0 %490
    %v493 = vadd.f32 %v483, %v491
    %v494 = vtanh.pop %v493
    %496 = vrot.lane.b32.xlu0 %v494, 32
    %v497 = vpop.permute.xlu0 %496
    %v499 = vmul.f32 %v482, %v497
    %s500 = scalar_lea.vmem [#allocation2], 56
    %v501 = vld [vmem:[%s500] sm:$0xff]
    %503 = vrot.lane.b32.xlu0 %v499, 64
    %v504 = vpop.permute.xlu0 %503
    %v505 = vsel %vm160, %v504, 0
    %507 = vmatpush.msra.mxu0 0.0
    %508 = vmatpush.msra.mxu0 0.0
    %509 = vmatpush.msra.mxu0 0.0
    %510 = vmatpush.msra.mxu0 0.0
    %511 = vmatpush.msra.mxu0 0.0
    %512 = vmatpush.msra.mxu0 0.0
    %513 = vmatpush.msra.mxu0 0.0
    %514 = vmatpush.msra.mxu0 0.0
    %515 = vmatpush.msra.mxu0 0.0
    %516 = vmatpush.msra.mxu0 0.0
    %517 = vmatpush.msra.mxu0 0.0
    %518 = vmatpush.msra.mxu0 0.0
    %519 = vmatpush.msra.mxu0 %v156
    %520 = vmatpush.msra.mxu0 %v155
    %521 = vmatpush.msra.mxu0 %v154
    %522 = vmatpush.msra.mxu0 %v153
    %523 = vmatmul.f32.gmra.mxu0 %v505
    %v524 = vpop.f32.mrf.mxu0
    %v525 = vadd.f32 0.0, %v524
    %526 = vdwg.mxu0
    %v527 = vadd.f32 %v501, %v525
    %v528 = vmul.f32 %v527, %v158
    %v529 = vtanh.pop %v528
    %v530 = vadd.f32 %v529, 1.0
    %v531 = vmul.f32 %v530, 0.5
    %v532 = vmul.f32 %v531, %v493
    %534 = vrot.lane.b32.xlu0 %v529, 32
    %v535 = vpop.permute.xlu0 %534
    %v537 = vmul.f32 %v531, %v535
    %539 = vrot.lane.b32.xlu0 %v537, 32
    %v540 = vpop.permute.xlu0 %539
    %v542 = vadd.f32 %v532, %v540
    %v543 = vtanh.pop %v542
    %545 = vrot.lane.b32.xlu0 %v543, 32
    %v546 = vpop.permute.xlu0 %545
    %v548 = vmul.f32 %v531, %v546
    %550 = vrot.lane.b32.xlu0 %v548, 64
    %v551 = vpop.permute.xlu0 %550
    %553 = vst.msk [vmem:[%s3] sm:$0xff] %vm160, %v551
    // Predicated region
    $region18: #{_lambda_.1} parent=1 // pred_check
      _
    $region19: #{_lambda_.1} parent=1 // pred_check_branch
      %555 = sbr.rel (0) target = $region21
    $region20: #{_lambda_.1} parent=1 // pred_region
      _
    $region21: #{_lambda_.1} parent=1 // pred_fallthru
      _
    // Predicated region
    $region22: #{_lambda_.1} parent=1 // pred_check
      _
    $region23: #{_lambda_.1} parent=1 // pred_check_branch
      %557 = sbr.rel (0) target = $region25
    $region24: #{_lambda_.1} parent=1 // pred_region
      _
    $region25: #{_lambda_.1} parent=1 // pred_fallthru
      _
    %558 = vsyncpa [#allocation4], 1

</llo_original>
